<compile_context>
chip_gen: v6e
topology: v6e:2x2x1
jax: 0.10.0
libtpu: 0.0.40
codegen_flags: <defaults>
</compile_context>

<pallas_src>
import jax
import jax.numpy as jnp
from jax.experimental import pallas as pl
from jax.experimental.pallas import tpu as pltpu


def _round_up(x, m):
    return (x + m - 1) // m * m


def _fused_embed_mean_fc_kernel(ids_ref, table_ref, w_ref, b_ref, out_ref, acc_ref):
    """Grid = (batch tiles, vocab tiles).  Vocab axis is the reduction.

    ids_ref:   (tB, S)   int32  token ids for this batch tile (grid-invariant in k)
    table_ref: (tV, Ep)  f32    one vocab slab of the zero-padded embedding table
    w_ref:     (Ep, Lp)  f32    fc weight, pre-transposed and pre-scaled by 1/S
    b_ref:     (1,  Lp)  f32    fc bias (zero-padded)
    out_ref:   (tB, Lp)  f32    written only at the last vocab step
    acc_ref:   (tB, Ep)  f32    VMEM scratch: running sum of embeddings
    """
    k = pl.program_id(1)

    @pl.when(k == 0)
    def _():
        acc_ref[...] = jnp.zeros_like(acc_ref)

    ids = ids_ref[...]                      # (tB, S) int32
    tb, seq = ids.shape
    tv = table_ref.shape[0]

    # counts[b, v] = #occurrences of vocab id (k*tV + v) in row b of this tile.
    # Built with VPU compares against a lane iota; S is small and static, so a
    # short unrolled loop keeps the working set at a single (tB, tV) tile.
    v_iota = k * tv + jax.lax.broadcasted_iota(jnp.int32, (tb, tv), 1)
    counts = jnp.zeros((tb, tv), jnp.float32)
    for s in range(seq):
        counts = counts + (v_iota == ids[:, s : s + 1]).astype(jnp.float32)

    # Partial sum of embeddings over the sequence for this vocab slab (MXU #1).
    acc_ref[...] += jnp.dot(counts, table_ref[...],
                            preferred_element_type=jnp.float32)

    # fc: (sum * 1/S) @ W^T + b ; the 1/S is already folded into w_ref (MXU #2).
    @pl.when(k == pl.num_programs(1) - 1)
    def _():
        out_ref[...] = (
            jnp.dot(acc_ref[...], w_ref[...], preferred_element_type=jnp.float32)
            + b_ref[...]
        )


def base_model_forward(content, emb_table, fc_weight, fc_bias,
                       *, batch_tile=256, vocab_tile=512):
    """content: (B, S) int ids; emb_table: (V, E); fc_weight: (L, E); fc_bias: (L,)."""
    B, S = content.shape
    V, E = emb_table.shape
    L = fc_bias.shape[0]

    # Lane/sublane-friendly padded sizes (128-granular matmul dims, 8-granular
    # batch tile).  Zero padding keeps the math exact: padded vocab rows are
    # never counted, padded E columns are zero, padded L columns get sliced off.
    Ep = _round_up(E, 128)
    Lp = _round_up(L, 128)
    tV = min(vocab_tile, _round_up(V, 128))
    Vp = _round_up(V, tV)
    tB = min(batch_tile, _round_up(B, 8))
    Bp = _round_up(B, tB)

    ids = jnp.zeros((Bp, S), jnp.int32).at[:B, :].set(content.astype(jnp.int32))
    table_p = jnp.zeros((Vp, Ep), jnp.float32).at[:V, :E].set(
        emb_table.astype(jnp.float32))
    # Pre-transpose the fc weight to (E, L) and fold in the 1/S mean scale.
    w_p = jnp.zeros((Ep, Lp), jnp.float32).at[:E, :L].set(
        fc_weight.T.astype(jnp.float32) * (1.0 / S))
    b_p = jnp.zeros((1, Lp), jnp.float32).at[:, :L].set(
        fc_bias.astype(jnp.float32))

    out_p = pl.pallas_call(
        _fused_embed_mean_fc_kernel,
        out_shape=jax.ShapeDtypeStruct((Bp, Lp), jnp.float32),
        grid_spec=pltpu.PrefetchScalarGridSpec(
            num_scalar_prefetch=0,
            grid=(Bp // tB, Vp // tV),          # (batch tiles, vocab tiles)
            in_specs=[
                pl.BlockSpec((tB, S), lambda i, k: (i, 0)),    # token ids (reused over k)
                pl.BlockSpec((tV, Ep), lambda i, k: (k, 0)),   # streamed table slab
                pl.BlockSpec((Ep, Lp), lambda i, k: (0, 0)),   # fc weight (pre-scaled)
                pl.BlockSpec((1, Lp), lambda i, k: (0, 0)),    # fc bias
            ],
            out_specs=pl.BlockSpec((tB, Lp), lambda i, k: (i, 0)),
            scratch_shapes=[pltpu.VMEM((tB, Ep), jnp.float32)],  # embedding-sum accumulator
        ),
        compiler_params=pltpu.CompilerParams(
            # batch tiles shard across TCs on v7x; vocab axis is a reduction.
            dimension_semantics=("parallel", "arbitrary"),
            vmem_limit_bytes=32 * 1024 * 1024,   # fits v5e/v6e (128 MiB) and v7x (64 MiB)
        ),
    )(ids, table_p, w_p, b_p)

    return out_p[:B, :L]


if __name__ == "__main__":
    # Small synthetic config consistent with the module's forward.
    vocab_size = 32
    embedding_dim = 32
    label_size = 8
    batch = 2
    seq = 8

    key = jax.random.PRNGKey(0)
    k_emb, k_w, k_b, k_ids = jax.random.split(key, 4)

    # Deterministic parameter init (mimics nn.Embedding ~N(0,1) and
    # nn.Linear uniform(-1/sqrt(E), 1/sqrt(E))).
    emb_table = jax.random.normal(k_emb, (vocab_size, embedding_dim), jnp.float32)
    bound = 1.0 / jnp.sqrt(jnp.float32(embedding_dim))
    fc_weight = jax.random.uniform(
        k_w, (label_size, embedding_dim), jnp.float32, -bound, bound)
    fc_bias = jax.random.uniform(k_b, (label_size,), jnp.float32, -bound, bound)

    content = jax.random.randint(k_ids, (batch, seq), 0, vocab_size, jnp.int32)

    fwd = jax.jit(base_model_forward)
    out = fwd(content, emb_table, fc_weight, fc_bias)
    jax.block_until_ready(out)

    # Reference check in plain JAX (matches the PyTorch forward).
    ref = jnp.take(emb_table, content, axis=0).mean(axis=1) @ fc_weight.T + fc_bias
    assert out.shape == (batch, label_size)
    assert jnp.allclose(out, ref, atol=1e-5, rtol=1e-5), float(
        jnp.max(jnp.abs(out - ref)))

    print("KERNEL_OK")
</pallas_src>

<mosaic_0001>
module attributes {stable_mosaic.version = 11 : i64} {
  func.func @_fused_embed_mean_fc_kernel(%arg0: i32, %arg1: i32, %arg2: memref<8x8xi32, #tpu.memory_space<vmem>>, %arg3: memref<128x128xf32, #tpu.memory_space<vmem>>, %arg4: memref<128x128xf32, #tpu.memory_space<vmem>>, %arg5: memref<1x128xf32, #tpu.memory_space<vmem>>, %arg6: memref<8x128xf32, #tpu.memory_space<vmem>>, %arg7: memref<8x128xf32, #tpu.memory_space<vmem>>) attributes {dimension_semantics = [#tpu.dimension_semantics<parallel>, #tpu.dimension_semantics<arbitrary>], iteration_bounds = array<i64: 1, 1>, scalar_prefetch = 0 : i64, scratch_operands = 1 : i64, tpu.core_type = #tpu.core_type<tc>, window_params = [{transform_indices = @transform_0, window_bounds = array<i64: 8, 8>}, {transform_indices = @transform_1, window_bounds = array<i64: 128, 128>}, {pipeline_mode = #tpu.pipeline_mode<synchronous>, transform_indices = @transform_2, window_bounds = array<i64: 128, 128>}, {pipeline_mode = #tpu.pipeline_mode<synchronous>, transform_indices = @transform_3, window_bounds = array<i64: 1, 128>}, {transform_indices = @transform_4, window_bounds = array<i64: 8, 128>}]} {
    %c0_i32 = arith.constant 0 : i32
    %0 = arith.cmpi eq, %arg1, %c0_i32 : i32
    %1 = arith.extui %0 : i1 to i32
    %c0_i32_0 = arith.constant 0 : i32
    %2 = arith.cmpi ne, %1, %c0_i32_0 : i32
    scf.if %2 {
      %cst_11 = arith.constant 0.000000e+00 : f32
      %65 = vector.broadcast %cst_11 : f32 to vector<8x128xf32>
      %c0_12 = arith.constant 0 : index
      %c0_13 = arith.constant 0 : index
      %66 = vector.load %arg7[%c0_12, %c0_13] : memref<8x128xf32, #tpu.memory_space<vmem>>, vector<8x128xf32>
      tpu.vector_store %arg7[%c0_12, %c0_13], %65 {strides = array<i32>} : memref<8x128xf32, #tpu.memory_space<vmem>>, vector<8x128xf32>,
    } else {
    }
    %c0 = arith.constant 0 : index
    %c0_1 = arith.constant 0 : index
    %3 = vector.load %arg2[%c0, %c0_1] : memref<8x8xi32, #tpu.memory_space<vmem>>, vector<8x8xi32>
    %c128_i32 = arith.constant 128 : i32
    %4 = arith.muli %arg1, %c128_i32 : i32
    %5 = tpu.iota {dimensions = array<i32: 1>} : vector<8x128xi32>
    %6 = vector.broadcast %4 : i32 to vector<8x128xi32>
    %7 = arith.addi %6, %5 : vector<8x128xi32>
    %cst = arith.constant 0.000000e+00 : f32
    %8 = vector.broadcast %cst : f32 to vector<8x128xf32>
    %9 = vector.extract_strided_slice %3 {offsets = [0, 0], sizes = [8, 1], strides = [1, 1]} : vector<8x8xi32> to vector<8x1xi32>
    %10 = vector.broadcast %9 : vector<8x1xi32> to vector<8x128xi32>
    %11 = arith.cmpi eq, %7, %10 : vector<8x128xi32>
    %12 = arith.extui %11 : vector<8x128xi1> to vector<8x128xi32>
    %13 = arith.sitofp %12 : vector<8x128xi32> to vector<8x128xf32>
    %14 = arith.addf %8, %13 : vector<8x128xf32>
    %15 = vector.extract_strided_slice %3 {offsets = [0, 1], sizes = [8, 1], strides = [1, 1]} : vector<8x8xi32> to vector<8x1xi32>
    %16 = vector.broadcast %15 : vector<8x1xi32> to vector<8x128xi32>
    %17 = arith.cmpi eq, %7, %16 : vector<8x128xi32>
    %18 = arith.extui %17 : vector<8x128xi1> to vector<8x128xi32>
    %19 = arith.sitofp %18 : vector<8x128xi32> to vector<8x128xf32>
    %20 = arith.addf %14, %19 : vector<8x128xf32>
    %21 = vector.extract_strided_slice %3 {offsets = [0, 2], sizes = [8, 1], strides = [1, 1]} : vector<8x8xi32> to vector<8x1xi32>
    %22 = vector.broadcast %21 : vector<8x1xi32> to vector<8x128xi32>
    %23 = arith.cmpi eq, %7, %22 : vector<8x128xi32>
    %24 = arith.extui %23 : vector<8x128xi1> to vector<8x128xi32>
    %25 = arith.sitofp %24 : vector<8x128xi32> to vector<8x128xf32>
    %26 = arith.addf %20, %25 : vector<8x128xf32>
    %27 = vector.extract_strided_slice %3 {offsets = [0, 3], sizes = [8, 1], strides = [1, 1]} : vector<8x8xi32> to vector<8x1xi32>
    %28 = vector.broadcast %27 : vector<8x1xi32> to vector<8x128xi32>
    %29 = arith.cmpi eq, %7, %28 : vector<8x128xi32>
    %30 = arith.extui %29 : vector<8x128xi1> to vector<8x128xi32>
    %31 = arith.sitofp %30 : vector<8x128xi32> to vector<8x128xf32>
    %32 = arith.addf %26, %31 : vector<8x128xf32>
    %33 = vector.extract_strided_slice %3 {offsets = [0, 4], sizes = [8, 1], strides = [1, 1]} : vector<8x8xi32> to vector<8x1xi32>
    %34 = vector.broadcast %33 : vector<8x1xi32> to vector<8x128xi32>
    %35 = arith.cmpi eq, %7, %34 : vector<8x128xi32>
    %36 = arith.extui %35 : vector<8x128xi1> to vector<8x128xi32>
    %37 = arith.sitofp %36 : vector<8x128xi32> to vector<8x128xf32>
    %38 = arith.addf %32, %37 : vector<8x128xf32>
    %39 = vector.extract_strided_slice %3 {offsets = [0, 5], sizes = [8, 1], strides = [1, 1]} : vector<8x8xi32> to vector<8x1xi32>
    %40 = vector.broadcast %39 : vector<8x1xi32> to vector<8x128xi32>
    %41 = arith.cmpi eq, %7, %40 : vector<8x128xi32>
    %42 = arith.extui %41 : vector<8x128xi1> to vector<8x128xi32>
    %43 = arith.sitofp %42 : vector<8x128xi32> to vector<8x128xf32>
    %44 = arith.addf %38, %43 : vector<8x128xf32>
    %45 = vector.extract_strided_slice %3 {offsets = [0, 6], sizes = [8, 1], strides = [1, 1]} : vector<8x8xi32> to vector<8x1xi32>
    %46 = vector.broadcast %45 : vector<8x1xi32> to vector<8x128xi32>
    %47 = arith.cmpi eq, %7, %46 : vector<8x128xi32>
    %48 = arith.extui %47 : vector<8x128xi1> to vector<8x128xi32>
    %49 = arith.sitofp %48 : vector<8x128xi32> to vector<8x128xf32>
    %50 = arith.addf %44, %49 : vector<8x128xf32>
    %51 = vector.extract_strided_slice %3 {offsets = [0, 7], sizes = [8, 1], strides = [1, 1]} : vector<8x8xi32> to vector<8x1xi32>
    %52 = vector.broadcast %51 : vector<8x1xi32> to vector<8x128xi32>
    %53 = arith.cmpi eq, %7, %52 : vector<8x128xi32>
    %54 = arith.extui %53 : vector<8x128xi1> to vector<8x128xi32>
    %55 = arith.sitofp %54 : vector<8x128xi32> to vector<8x128xf32>
    %56 = arith.addf %50, %55 : vector<8x128xf32>
    %c0_2 = arith.constant 0 : index
    %c0_3 = arith.constant 0 : index
    %57 = vector.load %arg7[%c0_2, %c0_3] : memref<8x128xf32, #tpu.memory_space<vmem>>, vector<8x128xf32>
    %c0_4 = arith.constant 0 : index
    %c0_5 = arith.constant 0 : index
    %58 = vector.load %arg3[%c0_4, %c0_5] : memref<128x128xf32, #tpu.memory_space<vmem>>, vector<128x128xf32>
    %cst_6 = arith.constant dense<0.000000e+00> : vector<8x128xf32>
    %59 = tpu.matmul %56, %58, %cst_6 {dimension_numbers = #tpu.dot_dimension_numbers<[1], [0], [0], [1], [0, 0, 1, 1], [], []>} : vector<8x128xf32>, vector<128x128xf32>, vector<8x128xf32> -> vector<8x128xf32>
    %60 = arith.addf %57, %59 : vector<8x128xf32>
    %c0_7 = arith.constant 0 : index
    %c0_8 = arith.constant 0 : index
    %61 = vector.load %arg7[%c0_7, %c0_8] : memref<8x128xf32, #tpu.memory_space<vmem>>, vector<8x128xf32>
    tpu.vector_store %arg7[%c0_7, %c0_8], %60 {strides = array<i32>} : memref<8x128xf32, #tpu.memory_space<vmem>>, vector<8x128xf32>,
    %c0_i32_9 = arith.constant 0 : i32
    %62 = arith.cmpi eq, %arg1, %c0_i32_9 : i32
    %63 = arith.extui %62 : i1 to i32
    %c0_i32_10 = arith.constant 0 : i32
    %64 = arith.cmpi ne, %63, %c0_i32_10 : i32
    scf.if %64 {
      %c0_11 = arith.constant 0 : index
      %c0_12 = arith.constant 0 : index
      %65 = vector.load %arg7[%c0_11, %c0_12] : memref<8x128xf32, #tpu.memory_space<vmem>>, vector<8x128xf32>
      %c0_13 = arith.constant 0 : index
      %c0_14 = arith.constant 0 : index
      %66 = vector.load %arg4[%c0_13, %c0_14] : memref<128x128xf32, #tpu.memory_space<vmem>>, vector<128x128xf32>
      %cst_15 = arith.constant dense<0.000000e+00> : vector<8x128xf32>
      %67 = tpu.matmul %65, %66, %cst_15 {dimension_numbers = #tpu.dot_dimension_numbers<[1], [0], [0], [1], [0, 0, 1, 1], [], []>} : vector<8x128xf32>, vector<128x128xf32>, vector<8x128xf32> -> vector<8x128xf32>
      %c0_16 = arith.constant 0 : index
      %c0_17 = arith.constant 0 : index
      %68 = vector.load %arg5[%c0_16, %c0_17] : memref<1x128xf32, #tpu.memory_space<vmem>>, vector<1x128xf32>
      %69 = vector.broadcast %68 : vector<1x128xf32> to vector<8x128xf32>
      %70 = arith.addf %67, %69 : vector<8x128xf32>
      %c0_18 = arith.constant 0 : index
      %c0_19 = arith.constant 0 : index
      %71 = vector.load %arg6[%c0_18, %c0_19] : memref<8x128xf32, #tpu.memory_space<vmem>>, vector<8x128xf32>
      tpu.vector_store %arg6[%c0_18, %c0_19], %70 {strides = array<i32>} : memref<8x128xf32, #tpu.memory_space<vmem>>, vector<8x128xf32>,
    } else {
    }
    return
  }
  func.func @transform_0(%arg0: i32, %arg1: i32) -> (i32, i32) {
    %c0_i32 = arith.constant 0 : i32
    %c0_i32_0 = arith.constant 0 : i32
    return %arg0, %c0_i32 : i32, i32
  }
  func.func @transform_1(%arg0: i32, %arg1: i32) -> (i32, i32) {
    %c0_i32 = arith.constant 0 : i32
    %c0_i32_0 = arith.constant 0 : i32
    return %arg1, %c0_i32 : i32, i32
  }
  func.func @transform_2(%arg0: i32, %arg1: i32) -> (i32, i32) {
    %c0_i32 = arith.constant 0 : i32
    %c0_i32_0 = arith.constant 0 : i32
    %c0_i32_1 = arith.constant 0 : i32
    return %c0_i32, %c0_i32_0 : i32, i32
  }
  func.func @transform_3(%arg0: i32, %arg1: i32) -> (i32, i32) {
    %c0_i32 = arith.constant 0 : i32
    %c0_i32_0 = arith.constant 0 : i32
    %c0_i32_1 = arith.constant 0 : i32
    return %c0_i32, %c0_i32_0 : i32, i32
  }
  func.func @transform_4(%arg0: i32, %arg1: i32) -> (i32, i32) {
    %c0_i32 = arith.constant 0 : i32
    %c0_i32_0 = arith.constant 0 : i32
    return %arg0, %c0_i32 : i32, i32
  }
}

</mosaic_0001>

<llo_original>
// kernel: base_model_forward.1
$region0: #{base_model_forward.1}
  #allocation0 [shape = 'u32[]', space=smem, size = 0x4, offset = 0x4, fixed_abs, tag = 'smem constant byte address 0x4 - core index']
  #allocation1 [shape = 'u32[144,128]{1,0:T(1,128)}', space=vmem, size = 0x12000, scoped, tag = 'internal scratch']
  #allocation2 [shape = 'f32[8,128]{1,0:T(8,128)}', space=vmem, size = 0x1000, scoped, tag = 'scratch operand']
  %s0 = inlined_call_operand.vmem [shape: s32[8,8], index: 0, kind: input, shape index: {}]
  %s1 = inlined_call_operand.vmem [shape: f32[128,128], index: 1, kind: input, shape index: {}]
  %s2 = inlined_call_operand.vmem [shape: f32[128,128], index: 2, kind: input, shape index: {}]
  %s3 = inlined_call_operand.vmem [shape: f32[1,128], index: 3, kind: input, shape index: {}]
  %s4 = inlined_call_operand.vmem [shape: f32[8,128], index: 4, kind: output, shape index: {}]
  %s5 = sld [smem:[#allocation0]]
  $region34: #{base_model_forward.1} parent=0
    _
  %s7 = ssub.s32 1, %s5
  %s8 = scalar_select 0, %s7, %s5
  // Predicated region
  $region2: #{base_model_forward.1} parent=0 // pred_check
    _
  $region3: #{base_model_forward.1} parent=0 // pred_check_branch
    %10 = sbr.rel (0) target = $region5
  $region4: #{base_model_forward.1} parent=0 // pred_region
    _
  $region5: #{base_model_forward.1} parent=0 // pred_fallthru
    _
  // Predicated region
  $region6: #{base_model_forward.1} parent=0 // pred_check
    _
  $region7: #{base_model_forward.1} parent=0 // pred_check_branch
    %12 = sbr.rel (0) target = $region9
  $region8: #{base_model_forward.1} parent=0 // pred_region
    _
  $region9: #{base_model_forward.1} parent=0 // pred_fallthru
    _
  // Predicated region
  $region10: #{base_model_forward.1} parent=0 // pred_check
    _
  $region11: #{base_model_forward.1} parent=0 // pred_check_branch
    %14 = sbr.rel (0) target = $region13
  $region12: #{base_model_forward.1} parent=0 // pred_region
    _
  $region13: #{base_model_forward.1} parent=0 // pred_fallthru
    _
  // Predicated region
  $region14: #{base_model_forward.1} parent=0 // pred_check
    _
  $region15: #{base_model_forward.1} parent=0 // pred_check_branch
    %16 = sbr.rel (0) target = $region17
  $region16: #{base_model_forward.1} parent=0 // pred_region
    _
  $region17: #{base_model_forward.1} parent=0 // pred_fallthru
    _
  %p17 = scmp.eq.s32.totalorder 0, 0
  // Predicated region
  $region18: #{base_model_forward.1} parent=0 // pred_check
    %p18 = pneg %p17
  $region19: #{base_model_forward.1} parent=0 // pred_check_branch
    %20 = sbr.rel (%p18) target = $region21
  $region20: #{base_model_forward.1} parent=0 // pred_region
    %21 = vst [vmem:[#allocation2] sm:$0xff] 0.0
  $region21: #{base_model_forward.1} parent=0 // pred_fallthru
    _
  %v22 = vld [vmem:[%s0] sm:$0xff]
  %s23 = smul.u32 0, 128
  %v24 = vlaneseq
  %v25 = vand.u32 %v24, 127
  %v26 = vstv %s23
  %v27 = vadd.s32 %v26, %v25
  %28 = vset.pattern.permute.xlu0 0
  %29 = vperm.xlu0 %28, %v22
  %v30 = vpop.permute.xlu0 %29
  %vm31 = vcmp.eq.s32.totalorder %v27, %v30
  %v32 = vsel %vm31, 1, 0
  %v33 = vcvt.s32.f32 %v32
  %v34 = vadd.f32 %v33, 0.0
  %35 = vset.pattern.permute.xlu0 1
  %36 = vperm.xlu0 %35, %v22
  %v37 = vpop.permute.xlu0 %36
  %vm38 = vcmp.eq.s32.totalorder %v27, %v37
  %v39 = vsel %vm38, 1, 0
  %v40 = vcvt.s32.f32 %v39
  %v41 = vadd.f32 %v34, %v40
  %42 = vset.pattern.permute.xlu0 2
  %43 = vperm.xlu0 %42, %v22
  %v44 = vpop.permute.xlu0 %43
  %vm45 = vcmp.eq.s32.totalorder %v27, %v44
  %v46 = vsel %vm45, 1, 0
  %v47 = vcvt.s32.f32 %v46
  %v48 = vadd.f32 %v41, %v47
  %49 = vset.pattern.permute.xlu0 3
  %50 = vperm.xlu0 %49, %v22
  %v51 = vpop.permute.xlu0 %50
  %vm52 = vcmp.eq.s32.totalorder %v27, %v51
  %v53 = vsel %vm52, 1, 0
  %v54 = vcvt.s32.f32 %v53
  %v55 = vadd.f32 %v48, %v54
  %56 = vset.pattern.permute.xlu0 4
  %57 = vperm.xlu0 %56, %v22
  %v58 = vpop.permute.xlu0 %57
  %vm59 = vcmp.eq.s32.totalorder %v27, %v58
  %v60 = vsel %vm59, 1, 0
  %v61 = vcvt.s32.f32 %v60
  %v62 = vadd.f32 %v55, %v61
  %63 = vset.pattern.permute.xlu0 5
  %64 = vperm.xlu0 %63, %v22
  %v65 = vpop.permute.xlu0 %64
  %vm66 = vcmp.eq.s32.totalorder %v27, %v65
  %v67 = vsel %vm66, 1, 0
  %v68 = vcvt.s32.f32 %v67
  %v69 = vadd.f32 %v62, %v68
  %70 = vset.pattern.permute.xlu0 6
  %71 = vperm.xlu0 %70, %v22
  %v72 = vpop.permute.xlu0 %71
  %vm73 = vcmp.eq.s32.totalorder %v27, %v72
  %v74 = vsel %vm73, 1, 0
  %v75 = vcvt.s32.f32 %v74
  %v76 = vadd.f32 %v69, %v75
  %77 = vset.pattern.permute.xlu0 7
  %78 = vperm.xlu0 %77, %v22
  %v79 = vpop.permute.xlu0 %78
  %vm80 = vcmp.eq.s32.totalorder %v27, %v79
  %v81 = vsel %vm80, 1, 0
  %v82 = vcvt.s32.f32 %v81
  %v83 = vadd.f32 %v76, %v82
  %v84 = vld [vmem:[#allocation2] sm:$0xff]
  %v85 = vld [vmem:[%s1] sm:$0xff]
  %v86 = vld [vmem:[%s1 + $0x8] sm:$0xff]
  %v87 = vld [vmem:[%s1 + $0x10] sm:$0xff]
  %v88 = vld [vmem:[%s1 + $0x18] sm:$0xff]
  %v89 = vld [vmem:[%s1 + $0x20] sm:$0xff]
  %v90 = vld [vmem:[%s1 + $0x28] sm:$0xff]
  %v91 = vld [vmem:[%s1 + $0x30] sm:$0xff]
  %v92 = vld [vmem:[%s1 + $0x38] sm:$0xff]
  %v93 = vld [vmem:[%s1 + $0x40] sm:$0xff]
  %v94 = vld [vmem:[%s1 + $0x48] sm:$0xff]
  %v95 = vld [vmem:[%s1 + $0x50] sm:$0xff]
  %v96 = vld [vmem:[%s1 + $0x58] sm:$0xff]
  %v97 = vld [vmem:[%s1 + $0x60] sm:$0xff]
  %v98 = vld [vmem:[%s1 + $0x68] sm:$0xff]
  %v99 = vld [vmem:[%s1 + $0x70] sm:$0xff]
  %v100 = vld [vmem:[%s1 + $0x78] sm:$0xff]
  %101 = vmatprep.subr.mxu0 0.0
  %102 = vmatpush1.msra.mxu0 %v100
  %103 = vmatprep.subr.mxu0 0.0
  %104 = vmatpush1.msra.mxu0 %v99
  %105 = vmatprep.subr.mxu0 0.0
  %106 = vmatpush1.msra.mxu0 %v98
  %107 = vmatprep.subr.mxu0 0.0
  %108 = vmatpush1.msra.mxu0 %v97
  %109 = vmatprep.subr.mxu0 0.0
  %110 = vmatpush1.msra.mxu0 %v96
  %111 = vmatprep.subr.mxu0 0.0
  %112 = vmatpush1.msra.mxu0 %v95
  %113 = vmatprep.subr.mxu0 0.0
  %114 = vmatpush1.msra.mxu0 %v94
  %115 = vmatprep.subr.mxu0 0.0
  %116 = vmatpush1.msra.mxu0 %v93
  %117 = vmatprep.subr.mxu0 0.0
  %118 = vmatpush1.msra.mxu0 %v92
  %119 = vmatprep.subr.mxu0 0.0
  %120 = vmatpush1.msra.mxu0 %v91
  %121 = vmatprep.subr.mxu0 0.0
  %122 = vmatpush1.msra.mxu0 %v90
  %123 = vmatprep.subr.mxu0 0.0
  %124 = vmatpush1.msra.mxu0 %v89
  %125 = vmatprep.subr.mxu0 0.0
  %126 = vmatpush1.msra.mxu0 %v88
  %127 = vmatprep.subr.mxu0 0.0
  %128 = vmatpush1.msra.mxu0 %v87
  %129 = vmatprep.subr.mxu0 0.0
  %130 = vmatpush1.msra.mxu0 %v86
  %131 = vmatprep.subr.mxu0 0.0
  %132 = vmatpush1.msra.mxu0 %v85
  %133 = vmatprep.subr.mxu0 0.0
  %134 = vmatpush2.msra.mxu0 0.0
  %135 = vmatprep.subr.mxu0 0.0
  %136 = vmatpush2.msra.mxu0 0.0
  %137 = vmatprep.subr.mxu0 0.0
  %138 = vmatpush2.msra.mxu0 0.0
  %139 = vmatprep.subr.mxu0 0.0
  %140 = vmatpush2.msra.mxu0 0.0
  %141 = vmatprep.subr.mxu0 0.0
  %142 = vmatpush2.msra.mxu0 0.0
  %143 = vmatprep.subr.mxu0 0.0
  %144 = vmatpush2.msra.mxu0 0.0
  %145 = vmatprep.subr.mxu0 0.0
  %146 = vmatpush2.msra.mxu0 0.0
  %147 = vmatprep.subr.mxu0 0.0
  %148 = vmatpush2.msra.mxu0 0.0
  %149 = vmatprep.subr.mxu0 0.0
  %150 = vmatpush2.msra.mxu0 0.0
  %151 = vmatprep.subr.mxu0 0.0
  %152 = vmatpush2.msra.mxu0 0.0
  %153 = vmatprep.subr.mxu0 0.0
  %154 = vmatpush2.msra.mxu0 0.0
  %155 = vmatprep.subr.mxu0 0.0
  %156 = vmatpush2.msra.mxu0 0.0
  %157 = vmatprep.subr.mxu0 0.0
  %158 = vmatpush2.msra.mxu0 0.0
  %159 = vmatprep.subr.mxu0 0.0
  %160 = vmatpush2.msra.mxu0 0.0
  %161 = vmatprep.subr.mxu0 0.0
  %162 = vmatpush2.msra.mxu0 0.0
  %163 = vmatprep.subr.mxu0 0.0
  %164 = vmatpush2.msra.mxu0 0.0
  %165 = vmatprep.mubr.f32.mxu0 0.0
  %166 = vmatmul.mubr.f32.gmra.mxu0 %v83
  %v167 = vpop.f32.mrf.mxu0
  %v168 = vadd.f32 0.0, %v167
  %v169 = vpop.f32.mrf.mxu0
  %170 = vdwg.mxu0
  %v171 = vadd.f32 %v84, %v168
  %172 = vst [vmem:[#allocation2] sm:$0xff] %v171
  // Predicated region
  $region22: #{base_model_forward.1} parent=0 // pred_check
    %p173 = pneg %p17
  $region23: #{base_model_forward.1} parent=0 // pred_check_branch
    %175 = sbr.rel (%p173) target = $region25
  $region24: #{base_model_forward.1} parent=0 // pred_region
    %v176 = vld [vmem:[#allocation2] sm:$0xff]
    %v177 = vld [vmem:[%s2] sm:$0xff]
    %v178 = vld [vmem:[%s2 + $0x8] sm:$0xff]
    %v179 = vld [vmem:[%s2 + $0x10] sm:$0xff]
    %v180 = vld [vmem:[%s2 + $0x18] sm:$0xff]
    %v181 = vld [vmem:[%s2 + $0x20] sm:$0xff]
    %v182 = vld [vmem:[%s2 + $0x28] sm:$0xff]
    %v183 = vld [vmem:[%s2 + $0x30] sm:$0xff]
    %v184 = vld [vmem:[%s2 + $0x38] sm:$0xff]
    %v185 = vld [vmem:[%s2 + $0x40] sm:$0xff]
    %v186 = vld [vmem:[%s2 + $0x48] sm:$0xff]
    %v187 = vld [vmem:[%s2 + $0x50] sm:$0xff]
    %v188 = vld [vmem:[%s2 + $0x58] sm:$0xff]
    %v189 = vld [vmem:[%s2 + $0x60] sm:$0xff]
    %v190 = vld [vmem:[%s2 + $0x68] sm:$0xff]
    %v191 = vld [vmem:[%s2 + $0x70] sm:$0xff]
    %v192 = vld [vmem:[%s2 + $0x78] sm:$0xff]
    %v193 = vld [vmem:[%s3] sm:$0x1]
    %v195 = vlaneseq
    %v196 = vshrl.u32 %v195, 7
    %v197 = vsub.s32 0, %v196
    %v198 = vrot.slane %v193, %v197
    %200 = vmatprep.subr.mxu0 0.0
    %201 = vmatpush1.msra.mxu0 %v192
    %202 = vmatprep.subr.mxu0 0.0
    %203 = vmatpush1.msra.mxu0 %v191
    %204 = vmatprep.subr.mxu0 0.0
    %205 = vmatpush1.msra.mxu0 %v190
    %206 = vmatprep.subr.mxu0 0.0
    %207 = vmatpush1.msra.mxu0 %v189
    %208 = vmatprep.subr.mxu0 0.0
    %209 = vmatpush1.msra.mxu0 %v188
    %210 = vmatprep.subr.mxu0 0.0
    %211 = vmatpush1.msra.mxu0 %v187
    %212 = vmatprep.subr.mxu0 0.0
    %213 = vmatpush1.msra.mxu0 %v186
    %214 = vmatprep.subr.mxu0 0.0
    %215 = vmatpush1.msra.mxu0 %v185
    %216 = vmatprep.subr.mxu0 0.0
    %217 = vmatpush1.msra.mxu0 %v184
    %218 = vmatprep.subr.mxu0 0.0
    %219 = vmatpush1.msra.mxu0 %v183
    %220 = vmatprep.subr.mxu0 0.0
    %221 = vmatpush1.msra.mxu0 %v182
    %222 = vmatprep.subr.mxu0 0.0
    %223 = vmatpush1.msra.mxu0 %v181
    %224 = vmatprep.subr.mxu0 0.0
    %225 = vmatpush1.msra.mxu0 %v180
    %226 = vmatprep.subr.mxu0 0.0
    %227 = vmatpush1.msra.mxu0 %v179
    %228 = vmatprep.subr.mxu0 0.0
    %229 = vmatpush1.msra.mxu0 %v178
    %230 = vmatprep.subr.mxu0 0.0
    %231 = vmatpush1.msra.mxu0 %v177
    %232 = vmatprep.subr.mxu0 0.0
    %233 = vmatpush2.msra.mxu0 0.0
    %234 = vmatprep.subr.mxu0 0.0
    %235 = vmatpush2.msra.mxu0 0.0
    %236 = vmatprep.subr.mxu0 0.0
    %237 = vmatpush2.msra.mxu0 0.0
    %238 = vmatprep.subr.mxu0 0.0
    %239 = vmatpush2.msra.mxu0 0.0
    %240 = vmatprep.subr.mxu0 0.0
    %241 = vmatpush2.msra.mxu0 0.0
    %242 = vmatprep.subr.mxu0 0.0
    %243 = vmatpush2.msra.mxu0 0.0
    %244 = vmatprep.subr.mxu0 0.0
    %245 = vmatpush2.msra.mxu0 0.0
    %246 = vmatprep.subr.mxu0 0.0
    %247 = vmatpush2.msra.mxu0 0.0
    %248 = vmatprep.subr.mxu0 0.0
    %249 = vmatpush2.msra.mxu0 0.0
    %250 = vmatprep.subr.mxu0 0.0
    %251 = vmatpush2.msra.mxu0 0.0
    %252 = vmatprep.subr.mxu0 0.0
    %253 = vmatpush2.msra.mxu0 0.0
    %254 = vmatprep.subr.mxu0 0.0
    %255 = vmatpush2.msra.mxu0 0.0
    %256 = vmatprep.subr.mxu0 0.0
    %257 = vmatpush2.msra.mxu0 0.0
    %258 = vmatprep.subr.mxu0 0.0
    %259 = vmatpush2.msra.mxu0 0.0
    %260 = vmatprep.subr.mxu0 0.0
    %261 = vmatpush2.msra.mxu0 0.0
    %262 = vmatprep.subr.mxu0 0.0
    %263 = vmatpush2.msra.mxu0 0.0
    %264 = vmatprep.mubr.f32.mxu0 0.0
    %265 = vmatmul.mubr.f32.gmra.mxu0 %v176
    %v266 = vpop.f32.mrf.mxu0
    %v267 = vadd.f32 %v198, %v266
    %v268 = vpop.f32.mrf.mxu0
    %269 = vdwg.mxu0
    %270 = vst [vmem:[%s4] sm:$0xff] %v267
  $region25: #{base_model_forward.1} parent=0 // pred_fallthru
    _
  // Predicated region
  $region26: #{base_model_forward.1} parent=0 // pred_check
    _
  $region27: #{base_model_forward.1} parent=0 // pred_check_branch
    %272 = sbr.rel (0) target = $region29
  $region28: #{base_model_forward.1} parent=0 // pred_region
    _
  $region29: #{base_model_forward.1} parent=0 // pred_fallthru
    _
  // Predicated region
  $region30: #{base_model_forward.1} parent=0 // pred_check
    _
  $region31: #{base_model_forward.1} parent=0 // pred_check_branch
    %274 = sbr.rel (0) target = $region33
  $region32: #{base_model_forward.1} parent=0 // pred_region
    _
  $region33: #{base_model_forward.1} parent=0 // pred_fallthru
    _

</llo_original>
